<compile_context>
chip_gen: v7x
topology: tpu7x:2x2x1
jax: 0.10.0
libtpu: 0.0.40
codegen_flags: <defaults>
</compile_context>

<pallas_src>
import jax
import jax.numpy as jnp
from jax import lax
from jax.experimental import pallas as pl
from jax.experimental.pallas import tpu as pltpu


def _tds_fc_kernel(x_ref, w1_ref, w2_ref, vecs_ref, o_ref):
    """One (F, tile_t) slab: fc1 + ReLU, fc2, + residual, LayerNorm over F."""
    # MXU input (bf16 or f32).
    x_mm = x_ref[0].astype(w1_ref.dtype)                       # (F, tile_t)

    vecs = vecs_ref[...]                                       # (F, 4) f32
    b1, b2, gamma, beta = (vecs[:, 0:1], vecs[:, 1:2],
                           vecs[:, 2:3], vecs[:, 3:4])

    # fc1 + ReLU:  h = relu(W1 @ x + b1)   (W @ X form, T on the lane axis)
    h = jnp.dot(w1_ref[...], x_mm, preferred_element_type=jnp.float32) + b1
    h = jnp.maximum(h, 0.0)

    # fc2 + residual:  y = W2 @ h + b2 + x.  Residual is re-read from VMEM here
    # so no f32 copy of x stays live across the MXU-heavy region.
    y = jnp.dot(w2_ref[...], h.astype(w2_ref.dtype),
                preferred_element_type=jnp.float32) + b2
    y = y + x_ref[0].astype(jnp.float32)

    # LayerNorm over the feature (sublane) axis, eps = 1e-5 (PyTorch default).
    # Two-pass variance (y - mean)^2: robust to large post-residual means;
    # the extra VALU/XLU pass hides under the MXU work.
    inv_f = 1.0 / y.shape[0]
    mean = jnp.sum(y, axis=0, keepdims=True) * inv_f
    d = y - mean
    var = jnp.sum(d * d, axis=0, keepdims=True) * inv_f
    out = d * lax.rsqrt(var + 1e-5) * gamma + beta

    o_ref[0] = out.astype(o_ref.dtype)


def _vmem_capacity_bytes():
    try:
        return int(pltpu.get_tpu_info().vmem_capacity_bytes)
    except Exception:
        return 64 << 20          # conservative: v7x per-TensorCore VMEM


def _round_up(v, m):
    return ((v + m - 1) // m) * m


def _pick_tile_t(F, T, act_bytes, w_bytes, vmem_limit, weight_bufs):
    """Largest lane tile (multiple of 128) whose working set fits the budget."""
    # Resident constants: 2 (F,F) weight blocks + one lane-padded (F,4) f32 block.
    resident_consts = weight_bufs * (2 * F * F * w_bytes + F * 128 * 4)
    budget = int(vmem_limit * 0.85) - resident_consts
    t_cap = max(128, _round_up(T, 128))
    for cand in (1024, 512, 256, 128):
        if cand > t_cap:
            continue
        # double-buffered in + out activation blocks + live f32 intermediates
        per_tile = F * cand * (4 * act_bytes + 12)
        if per_tile <= budget:
            return cand
    return 128


def tds_fully_connected_block(x_nct, params, *, tile_t=None,
                              matmul_dtype=jnp.bfloat16):
    """x_nct: (N, F, T) array.  Returns (N, F, T), matching the PyTorch module.

    tile_t: lane-axis tile width (multiple of 128); None -> chosen from the
    chip's VMEM capacity.  T need not be a tile multiple (ragged tail handled
    in-kernel, no pad/slice HBM passes).  For mem-bound F, pass x in bf16 to
    halve activation HBM traffic (residual/LN still run in f32 in-kernel).
    """
    w1, b1, w2, b2, gamma, beta = params
    N, F, T = x_nct.shape
    act_bytes = x_nct.dtype.itemsize
    w_bytes = jnp.dtype(matmul_dtype).itemsize

    vmem_cap = _vmem_capacity_bytes()
    vmem_limit = max(32 << 20, int(vmem_cap * 0.75))   # ~96 MiB v5e/v6e, ~48 MiB v7x

    # Weights in MXU dtype (halves weight VMEM/DMA when bf16); bias/gamma/beta
    # packed into a single (F, 4) f32 operand.
    w1k = w1.astype(matmul_dtype)
    w2k = w2.astype(matmul_dtype)
    vecs = jnp.stack([b1.astype(jnp.float32), b2.astype(jnp.float32),
                      gamma.astype(jnp.float32), beta.astype(jnp.float32)],
                     axis=1)                                           # (F, 4)

    def make_call(single_buffer_consts):
        weight_bufs = 1 if single_buffer_consts else 2
        tt = tile_t if tile_t is not None else _pick_tile_t(
            F, T, act_bytes, w_bytes, vmem_limit, weight_bufs)
        t_tiles = pl.cdiv(T, tt)

        const_kwargs = {}
        if single_buffer_consts:
            # Constant index_map -> double-buffering would only double VMEM.
            const_kwargs = dict(pipeline_mode=pl.Buffered(1))

        x_spec = pl.BlockSpec((1, F, tt), lambda n, t: (n, 0, t))
        mat_spec = pl.BlockSpec((F, F), lambda n, t: (0, 0), **const_kwargs)
        vec_spec = pl.BlockSpec((F, 4), lambda n, t: (0, 0), **const_kwargs)
        # TODO(synk): at small F with exposed input DMA, try
        #   pipeline_mode=pl.Buffered(3) on x_spec only.
        # TODO(synk): for F >= ~1536-2048 add a K-reduction grid axis
        #   ("arbitrary") with an f32 VMEM accumulator so weight-tile VMEM stays
        #   bounded on v7x (64 MiB / TensorCore).

        cost = pl.CostEstimate(
            flops=int(4 * N * T * F * F + 10 * N * T * F),
            transcendentals=int(N * T),
            bytes_accessed=int(2 * N * F * T * act_bytes
                               + 2 * F * F * w_bytes + 4 * F * 4),
        )

        return pl.pallas_call(
            _tds_fc_kernel,
            out_shape=jax.ShapeDtypeStruct((N, F, T), x_nct.dtype),
            grid_spec=pltpu.PrefetchScalarGridSpec(
                num_scalar_prefetch=0,
                grid=(N, t_tiles),
                in_specs=[x_spec, mat_spec, mat_spec, vec_spec],
                out_specs=x_spec,
            ),
            compiler_params=pltpu.CompilerParams(
                # Both axes independent -> shards across the 2 TensorCores on
                # v7x; harmless on v5e/v6e.
                dimension_semantics=("parallel", "parallel"),
                vmem_limit_bytes=vmem_limit,
            ),
            cost_estimate=cost,
        )

    try:
        return make_call(True)(x_nct, w1k, w2k, vecs)
    except Exception:
        # pl.Buffered(1) unsupported on this JAX/Mosaic build: fall back to the
        # default double-buffered constant operands (correctness unchanged).
        return make_call(False)(x_nct, w1k, w2k, vecs)


def init_params(key, num_features):
    """Deterministic init mimicking nn.Linear / nn.LayerNorm shapes."""
    k1, k2, k3, k4 = jax.random.split(key, 4)
    bound = 1.0 / jnp.sqrt(num_features)
    w1 = jax.random.uniform(k1, (num_features, num_features), jnp.float32, -bound, bound)
    b1 = jax.random.uniform(k2, (num_features,), jnp.float32, -bound, bound)
    w2 = jax.random.uniform(k3, (num_features, num_features), jnp.float32, -bound, bound)
    b2 = jax.random.uniform(k4, (num_features,), jnp.float32, -bound, bound)
    gamma = jnp.ones((num_features,), jnp.float32)
    beta = jnp.zeros((num_features,), jnp.float32)
    return w1, b1, w2, b2, gamma, beta


def reference(x_nct, params):
    """Plain-JAX reference reproducing the PyTorch forward (f32 throughout)."""
    w1, b1, w2, b2, gamma, beta = params
    x = jnp.swapaxes(x_nct, -1, -2)                     # (N, T, F)
    h = jnp.maximum(x @ w1.T + b1, 0.0)
    y = h @ w2.T + b2
    y = jnp.swapaxes(y, -1, -2) + x_nct                 # residual in NCT
    yt = jnp.swapaxes(y, -1, -2)                        # (N, T, F)
    mean = jnp.mean(yt, axis=-1, keepdims=True)
    var = jnp.mean((yt - mean) ** 2, axis=-1, keepdims=True)
    norm = (yt - mean) / jnp.sqrt(var + 1e-5)
    out = norm * gamma + beta
    return jnp.swapaxes(out, -1, -2)                    # (N, F, T)


if __name__ == "__main__":
    key = jax.random.PRNGKey(0)
    kx, kp = jax.random.split(key)

    N, F, T = 2, 32, 200      # batch, num_features, time (T not a tile multiple)
    x = jax.random.normal(kx, (N, F, T), jnp.float32)
    params = init_params(kp, F)

    ref = reference(x, params)

    # f32 MXU path, explicit tile_t=128 (exercises a ragged last T-tile): tight check.
    out_f32 = jax.block_until_ready(
        tds_fully_connected_block(x, params, tile_t=128, matmul_dtype=jnp.float32))
    assert out_f32.shape == (N, F, T)
    assert jnp.allclose(out_f32, ref, atol=1e-4, rtol=1e-4), "f32 mismatch vs reference"

    # Default fast path: bf16 MXU inputs, auto tile_t / VMEM plan (f32 accumulation
    # + f32 residual/LN, so only matmul-input rounding differs from the reference).
    out_bf16 = jax.block_until_ready(tds_fully_connected_block(x, params))
    assert out_bf16.shape == (N, F, T)
    assert jnp.allclose(out_bf16, ref, atol=5e-2, rtol=5e-2), "bf16 mismatch vs reference"

    print("KERNEL_OK")
</pallas_src>

<mosaic_0001>
module attributes {stable_mosaic.version = 11 : i64} {
  func.func @_tds_fc_kernel(%arg0: i32, %arg1: i32, %arg2: memref<1x32x128xf32, #tpu.memory_space<vmem>>, %arg3: memref<32x32xf32, #tpu.memory_space<vmem>>, %arg4: memref<32x32xf32, #tpu.memory_space<vmem>>, %arg5: memref<32x4xf32, #tpu.memory_space<vmem>>, %arg6: memref<1x32x128xf32, #tpu.memory_space<vmem>>) attributes {dimension_semantics = [#tpu.dimension_semantics<parallel>, #tpu.dimension_semantics<parallel>], iteration_bounds = array<i64: 2, 2>, scalar_prefetch = 0 : i64, scratch_operands = 0 : i64, tpu.core_type = #tpu.core_type<tc>, window_params = [{transform_indices = @transform_0, window_bounds = array<i64: 1, 32, 128>}, {pipeline_mode = #tpu.pipeline_mode<synchronous>, transform_indices = @transform_1, window_bounds = array<i64: 32, 32>}, {pipeline_mode = #tpu.pipeline_mode<synchronous>, transform_indices = @transform_2, window_bounds = array<i64: 32, 32>}, {pipeline_mode = #tpu.pipeline_mode<synchronous>, transform_indices = @transform_3, window_bounds = array<i64: 32, 4>}, {transform_indices = @transform_4, window_bounds = array<i64: 1, 32, 128>}]} {
    %c0 = arith.constant 0 : index
    %c0_0 = arith.constant 0 : index
    %c0_1 = arith.constant 0 : index
    %0 = vector.load %arg2[%c0, %c0_0, %c0_1] : memref<1x32x128xf32, #tpu.memory_space<vmem>>, vector<1x32x128xf32>
    %1 = vector.shape_cast %0 : vector<1x32x128xf32> to vector<32x128xf32>
    %c0_2 = arith.constant 0 : index
    %c0_3 = arith.constant 0 : index
    %2 = vector.load %arg5[%c0_2, %c0_3] : memref<32x4xf32, #tpu.memory_space<vmem>>, vector<32x4xf32>
    %3 = vector.extract_strided_slice %2 {offsets = [0, 0], sizes = [32, 1], strides = [1, 1]} : vector<32x4xf32> to vector<32x1xf32>
    %4 = vector.extract_strided_slice %2 {offsets = [0, 1], sizes = [32, 1], strides = [1, 1]} : vector<32x4xf32> to vector<32x1xf32>
    %5 = vector.extract_strided_slice %2 {offsets = [0, 2], sizes = [32, 1], strides = [1, 1]} : vector<32x4xf32> to vector<32x1xf32>
    %6 = vector.extract_strided_slice %2 {offsets = [0, 3], sizes = [32, 1], strides = [1, 1]} : vector<32x4xf32> to vector<32x1xf32>
    %c0_4 = arith.constant 0 : index
    %c0_5 = arith.constant 0 : index
    %7 = vector.load %arg3[%c0_4, %c0_5] : memref<32x32xf32, #tpu.memory_space<vmem>>, vector<32x32xf32>
    %cst = arith.constant dense<0.000000e+00> : vector<32x128xf32>
    %8 = tpu.matmul %7, %1, %cst {dimension_numbers = #tpu.dot_dimension_numbers<[1], [0], [0], [1], [0, 0, 1, 1], [], []>} : vector<32x32xf32>, vector<32x128xf32>, vector<32x128xf32> -> vector<32x128xf32>
    %9 = vector.broadcast %3 : vector<32x1xf32> to vector<32x128xf32>
    %10 = arith.addf %8, %9 : vector<32x128xf32>
    %cst_6 = arith.constant 0.000000e+00 : f32
    %11 = vector.broadcast %cst_6 : f32 to vector<32x128xf32>
    %12 = arith.maximumf %10, %11 : vector<32x128xf32>
    %c0_7 = arith.constant 0 : index
    %c0_8 = arith.constant 0 : index
    %13 = vector.load %arg4[%c0_7, %c0_8] : memref<32x32xf32, #tpu.memory_space<vmem>>, vector<32x32xf32>
    %cst_9 = arith.constant dense<0.000000e+00> : vector<32x128xf32>
    %14 = tpu.matmul %13, %12, %cst_9 {dimension_numbers = #tpu.dot_dimension_numbers<[1], [0], [0], [1], [0, 0, 1, 1], [], []>} : vector<32x32xf32>, vector<32x128xf32>, vector<32x128xf32> -> vector<32x128xf32>
    %15 = vector.broadcast %4 : vector<32x1xf32> to vector<32x128xf32>
    %16 = arith.addf %14, %15 : vector<32x128xf32>
    %c0_10 = arith.constant 0 : index
    %c0_11 = arith.constant 0 : index
    %c0_12 = arith.constant 0 : index
    %17 = vector.load %arg2[%c0_10, %c0_11, %c0_12] : memref<1x32x128xf32, #tpu.memory_space<vmem>>, vector<1x32x128xf32>
    %18 = vector.shape_cast %17 : vector<1x32x128xf32> to vector<32x128xf32>
    %19 = arith.addf %16, %18 : vector<32x128xf32>
    %cst_13 = arith.constant dense<0.000000e+00> : vector<128xf32>
    %20 = vector.multi_reduction <add>, %19, %cst_13 [0] : vector<32x128xf32> to vector<128xf32>
    %21 = vector.shape_cast %20 : vector<128xf32> to vector<1x128xf32>
    %cst_14 = arith.constant 3.125000e-02 : f32
    %22 = vector.broadcast %cst_14 : f32 to vector<1x128xf32>
    %23 = arith.mulf %21, %22 : vector<1x128xf32>
    %24 = vector.broadcast %23 : vector<1x128xf32> to vector<32x128xf32>
    %25 = arith.subf %19, %24 : vector<32x128xf32>
    %26 = arith.mulf %25, %25 : vector<32x128xf32>
    %cst_15 = arith.constant dense<0.000000e+00> : vector<128xf32>
    %27 = vector.multi_reduction <add>, %26, %cst_15 [0] : vector<32x128xf32> to vector<128xf32>
    %28 = vector.shape_cast %27 : vector<128xf32> to vector<1x128xf32>
    %cst_16 = arith.constant 3.125000e-02 : f32
    %29 = vector.broadcast %cst_16 : f32 to vector<1x128xf32>
    %30 = arith.mulf %28, %29 : vector<1x128xf32>
    %cst_17 = arith.constant 9.99999974E-6 : f32
    %31 = vector.broadcast %cst_17 : f32 to vector<1x128xf32>
    %32 = arith.addf %30, %31 : vector<1x128xf32>
    %33 = math.rsqrt %32 : vector<1x128xf32>
    %34 = vector.broadcast %33 : vector<1x128xf32> to vector<32x128xf32>
    %35 = arith.mulf %25, %34 : vector<32x128xf32>
    %36 = vector.broadcast %5 : vector<32x1xf32> to vector<32x128xf32>
    %37 = arith.mulf %35, %36 : vector<32x128xf32>
    %38 = vector.broadcast %6 : vector<32x1xf32> to vector<32x128xf32>
    %39 = arith.addf %37, %38 : vector<32x128xf32>
    %c0_18 = arith.constant 0 : index
    %c0_19 = arith.constant 0 : index
    %c0_20 = arith.constant 0 : index
    %40 = vector.load %arg6[%c0_18, %c0_19, %c0_20] : memref<1x32x128xf32, #tpu.memory_space<vmem>>, vector<1x32x128xf32>
    %41 = vector.shape_cast %40 : vector<1x32x128xf32> to vector<32x128xf32>
    %42 = vector.shape_cast %39 : vector<32x128xf32> to vector<1x32x128xf32>
    tpu.vector_store %arg6[%c0_18, %c0_19, %c0_20], %42 {strides = array<i32>} : memref<1x32x128xf32, #tpu.memory_space<vmem>>, vector<1x32x128xf32>,
    return
  }
  func.func @transform_0(%arg0: i32, %arg1: i32) -> (i32, i32, i32) {
    %c0_i32 = arith.constant 0 : i32
    %c0_i32_0 = arith.constant 0 : i32
    return %arg0, %c0_i32, %arg1 : i32, i32, i32
  }
  func.func @transform_1(%arg0: i32, %arg1: i32) -> (i32, i32) {
    %c0_i32 = arith.constant 0 : i32
    %c0_i32_0 = arith.constant 0 : i32
    %c0_i32_1 = arith.constant 0 : i32
    return %c0_i32, %c0_i32_0 : i32, i32
  }
  func.func @transform_2(%arg0: i32, %arg1: i32) -> (i32, i32) {
    %c0_i32 = arith.constant 0 : i32
    %c0_i32_0 = arith.constant 0 : i32
    %c0_i32_1 = arith.constant 0 : i32
    return %c0_i32, %c0_i32_0 : i32, i32
  }
  func.func @transform_3(%arg0: i32, %arg1: i32) -> (i32, i32) {
    %c0_i32 = arith.constant 0 : i32
    %c0_i32_0 = arith.constant 0 : i32
    %c0_i32_1 = arith.constant 0 : i32
    return %c0_i32, %c0_i32_0 : i32, i32
  }
  func.func @transform_4(%arg0: i32, %arg1: i32) -> (i32, i32, i32) {
    %c0_i32 = arith.constant 0 : i32
    %c0_i32_0 = arith.constant 0 : i32
    return %arg0, %c0_i32, %arg1 : i32, i32, i32
  }
}

module attributes {stable_mosaic.version = 11 : i64} {
  func.func @_tds_fc_kernel(%arg0: i32, %arg1: i32, %arg2: memref<1x32x128xf32, #tpu.memory_space<vmem>>, %arg3: memref<32x32xf32, #tpu.memory_space<vmem>>, %arg4: memref<32x32xf32, #tpu.memory_space<vmem>>, %arg5: memref<32x4xf32, #tpu.memory_space<vmem>>, %arg6: memref<1x32x128xf32, #tpu.memory_space<vmem>>) attributes {dimension_semantics = [#tpu.dimension_semantics<parallel>, #tpu.dimension_semantics<parallel>], iteration_bounds = array<i64: 2, 2>, scalar_prefetch = 0 : i64, scratch_operands = 0 : i64, tpu.core_type = #tpu.core_type<tc>, window_params = [{transform_indices = @transform_0, window_bounds = array<i64: 1, 32, 128>}, {pipeline_mode = #tpu.pipeline_mode<synchronous>, transform_indices = @transform_1, window_bounds = array<i64: 32, 32>}, {pipeline_mode = #tpu.pipeline_mode<synchronous>, transform_indices = @transform_2, window_bounds = array<i64: 32, 32>}, {pipeline_mode = #tpu.pipeline_mode<synchronous>, transform_indices = @transform_3, window_bounds = array<i64: 32, 4>}, {transform_indices = @transform_4, window_bounds = array<i64: 1, 32, 128>}]} {
    %c0 = arith.constant 0 : index
    %c0_0 = arith.constant 0 : index
    %c0_1 = arith.constant 0 : index
    %0 = vector.load %arg2[%c0, %c0_0, %c0_1] : memref<1x32x128xf32, #tpu.memory_space<vmem>>, vector<1x32x128xf32>
    %1 = vector.shape_cast %0 : vector<1x32x128xf32> to vector<32x128xf32>
    %c0_2 = arith.constant 0 : index
    %c0_3 = arith.constant 0 : index
    %2 = vector.load %arg5[%c0_2, %c0_3] : memref<32x4xf32, #tpu.memory_space<vmem>>, vector<32x4xf32>
    %3 = vector.extract_strided_slice %2 {offsets = [0, 0], sizes = [32, 1], strides = [1, 1]} : vector<32x4xf32> to vector<32x1xf32>
    %4 = vector.extract_strided_slice %2 {offsets = [0, 1], sizes = [32, 1], strides = [1, 1]} : vector<32x4xf32> to vector<32x1xf32>
    %5 = vector.extract_strided_slice %2 {offsets = [0, 2], sizes = [32, 1], strides = [1, 1]} : vector<32x4xf32> to vector<32x1xf32>
    %6 = vector.extract_strided_slice %2 {offsets = [0, 3], sizes = [32, 1], strides = [1, 1]} : vector<32x4xf32> to vector<32x1xf32>
    %c0_4 = arith.constant 0 : index
    %c0_5 = arith.constant 0 : index
    %7 = vector.load %arg3[%c0_4, %c0_5] : memref<32x32xf32, #tpu.memory_space<vmem>>, vector<32x32xf32>
    %cst = arith.constant dense<0.000000e+00> : vector<32x128xf32>
    %8 = tpu.matmul %7, %1, %cst {dimension_numbers = #tpu.dot_dimension_numbers<[1], [0], [0], [1], [0, 0, 1, 1], [], []>} : vector<32x32xf32>, vector<32x128xf32>, vector<32x128xf32> -> vector<32x128xf32>
    %9 = vector.broadcast %3 : vector<32x1xf32> to vector<32x128xf32>
    %10 = arith.addf %8, %9 : vector<32x128xf32>
    %cst_6 = arith.constant 0.000000e+00 : f32
    %11 = vector.broadcast %cst_6 : f32 to vector<32x128xf32>
    %12 = arith.maximumf %10, %11 : vector<32x128xf32>
    %c0_7 = arith.constant 0 : index
    %c0_8 = arith.constant 0 : index
    %13 = vector.load %arg4[%c0_7, %c0_8] : memref<32x32xf32, #tpu.memory_space<vmem>>, vector<32x32xf32>
    %cst_9 = arith.constant dense<0.000000e+00> : vector<32x128xf32>
    %14 = tpu.matmul %13, %12, %cst_9 {dimension_numbers = #tpu.dot_dimension_numbers<[1], [0], [0], [1], [0, 0, 1, 1], [], []>} : vector<32x32xf32>, vector<32x128xf32>, vector<32x128xf32> -> vector<32x128xf32>
    %15 = vector.broadcast %4 : vector<32x1xf32> to vector<32x128xf32>
    %16 = arith.addf %14, %15 : vector<32x128xf32>
    %c0_10 = arith.constant 0 : index
    %c0_11 = arith.constant 0 : index
    %c0_12 = arith.constant 0 : index
    %17 = vector.load %arg2[%c0_10, %c0_11, %c0_12] : memref<1x32x128xf32, #tpu.memory_space<vmem>>, vector<1x32x128xf32>
    %18 = vector.shape_cast %17 : vector<1x32x128xf32> to vector<32x128xf32>
    %19 = arith.addf %16, %18 : vector<32x128xf32>
    %cst_13 = arith.constant dense<0.000000e+00> : vector<128xf32>
    %20 = vector.multi_reduction <add>, %19, %cst_13 [0] : vector<32x128xf32> to vector<128xf32>
    %21 = vector.shape_cast %20 : vector<128xf32> to vector<1x128xf32>
    %cst_14 = arith.constant 3.125000e-02 : f32
    %22 = vector.broadcast %cst_14 : f32 to vector<1x128xf32>
    %23 = arith.mulf %21, %22 : vector<1x128xf32>
    %24 = vector.broadcast %23 : vector<1x128xf32> to vector<32x128xf32>
    %25 = arith.subf %19, %24 : vector<32x128xf32>
    %26 = arith.mulf %25, %25 : vector<32x128xf32>
    %cst_15 = arith.constant dense<0.000000e+00> : vector<128xf32>
    %27 = vector.multi_reduction <add>, %26, %cst_15 [0] : vector<32x128xf32> to vector<128xf32>
    %28 = vector.shape_cast %27 : vector<128xf32> to vector<1x128xf32>
    %cst_16 = arith.constant 3.125000e-02 : f32
    %29 = vector.broadcast %cst_16 : f32 to vector<1x128xf32>
    %30 = arith.mulf %28, %29 : vector<1x128xf32>
    %cst_17 = arith.constant 9.99999974E-6 : f32
    %31 = vector.broadcast %cst_17 : f32 to vector<1x128xf32>
    %32 = arith.addf %30, %31 : vector<1x128xf32>
    %33 = math.rsqrt %32 : vector<1x128xf32>
    %34 = vector.broadcast %33 : vector<1x128xf32> to vector<32x128xf32>
    %35 = arith.mulf %25, %34 : vector<32x128xf32>
    %36 = vector.broadcast %5 : vector<32x1xf32> to vector<32x128xf32>
    %37 = arith.mulf %35, %36 : vector<32x128xf32>
    %38 = vector.broadcast %6 : vector<32x1xf32> to vector<32x128xf32>
    %39 = arith.addf %37, %38 : vector<32x128xf32>
    %c0_18 = arith.constant 0 : index
    %c0_19 = arith.constant 0 : index
    %c0_20 = arith.constant 0 : index
    %40 = vector.load %arg6[%c0_18, %c0_19, %c0_20] : memref<1x32x128xf32, #tpu.memory_space<vmem>>, vector<1x32x128xf32>
    %41 = vector.shape_cast %40 : vector<1x32x128xf32> to vector<32x128xf32>
    %42 = vector.shape_cast %39 : vector<32x128xf32> to vector<1x32x128xf32>
    tpu.vector_store %arg6[%c0_18, %c0_19, %c0_20], %42 {strides = array<i32>} : memref<1x32x128xf32, #tpu.memory_space<vmem>>, vector<1x32x128xf32>,
    return
  }
  func.func @transform_0(%arg0: i32, %arg1: i32) -> (i32, i32, i32) {
    %c0_i32 = arith.constant 0 : i32
    %c0_i32_0 = arith.constant 0 : i32
    return %arg0, %c0_i32, %arg1 : i32, i32, i32
  }
  func.func @transform_1(%arg0: i32, %arg1: i32) -> (i32, i32) {
    %c0_i32 = arith.constant 0 : i32
    %c0_i32_0 = arith.constant 0 : i32
    %c0_i32_1 = arith.constant 0 : i32
    return %c0_i32, %c0_i32_0 : i32, i32
  }
  func.func @transform_2(%arg0: i32, %arg1: i32) -> (i32, i32) {
    %c0_i32 = arith.constant 0 : i32
    %c0_i32_0 = arith.constant 0 : i32
    %c0_i32_1 = arith.constant 0 : i32
    return %c0_i32, %c0_i32_0 : i32, i32
  }
  func.func @transform_3(%arg0: i32, %arg1: i32) -> (i32, i32) {
    %c0_i32 = arith.constant 0 : i32
    %c0_i32_0 = arith.constant 0 : i32
    %c0_i32_1 = arith.constant 0 : i32
    return %c0_i32, %c0_i32_0 : i32, i32
  }
  func.func @transform_4(%arg0: i32, %arg1: i32) -> (i32, i32, i32) {
    %c0_i32 = arith.constant 0 : i32
    %c0_i32_0 = arith.constant 0 : i32
    return %arg0, %c0_i32, %arg1 : i32, i32, i32
  }
}

</mosaic_0001>

<llo_original>
// kernel: tpu_custom_call.1
$region0: #{tpu_custom_call.1}
  #allocation0 [shape = 'u32[]', space=smem, size = 0x4, offset = 0x4, fixed_abs, tag = 'smem constant byte address 0x4 - core index']
  #allocation1 [shape = 'u32[144,128]{1,0:T(1,128)}', space=vmem, size = 0x12000, scoped, tag = 'internal scratch']
  %s0 = inlined_call_operand.hbm [shape: f32[2,32,200], index: 0, kind: input, shape index: {}]
  %s1 = inlined_call_operand.vmem [shape: f32[32,32], index: 1, kind: input, shape index: {}]
  %s2 = inlined_call_operand.hbm [shape: f32[32,32], index: 2, kind: input, shape index: {}]
  %s3 = inlined_call_operand.vmem [shape: f32[32,4], index: 3, kind: input, shape index: {}]
  %s4 = inlined_call_operand.hbm [shape: f32[2,32,200], index: 4, kind: output, shape index: {}]
  %s5 = sld [smem:[#allocation0]]
  $region57: #{tpu_custom_call.1} parent=0
    _
  %s7 = ssub.s32 1, %s5
  %s8 = scalar_select 0, %s7, %s5
  $region1: #{tpu_custom_call.1} parent=0
    #allocation2 [shape = 'u8[32768]{0}', space=vmem, size = 0x8000, scoped, tag = 'input window, operand 0']
    #allocation3 [shape = 's32[2]{0}', space=sflag, size = 0x8, scoped, tag = 'scoped memory for tpu_custom_call.1']
    #allocation4 [shape = 's32[2]{0}', space=sflag, size = 0x8, scoped, tag = 'scoped memory for tpu_custom_call.1']
    #allocation5 [shape = 'u8[16384]{0}', space=vmem, size = 0x4000, scoped, tag = 'input window, operand 2, single buffered']
    #allocation6 [shape = 's32[1]{0}', space=sflag, size = 0x4, scoped, tag = 'scoped memory for tpu_custom_call.1']
    #allocation7 [shape = 'u8[32768]{0}', space=vmem, size = 0x8000, scoped, tag = 'output window, operand 0']
    %9 = vsyncpa [#allocation3], 0
    %s10 = scalar_lea.sflag [#allocation3], 1
    %11 = vsyncpa %s10, 0
    %12 = vsyncpa [#allocation6], 0
    %13 = vsyncpa [#allocation4], 0
    %s14 = scalar_lea.sflag [#allocation4], 1
    %15 = vsyncpa %s14, 0
    loop: start=0, step=1, limit=6
    $region2: #{tpu_custom_call.1} parent=1 // loop_pre_header
      _
    $region3: #{tpu_custom_call.1} parent=1 // loop_header
      %s17 = sphi 0, %s21
      %p18 = scmp.ge.s32.totalorder %s17, 6
      %s24 = sphi 0, %s36
      %s25 = sphi 0, %s32
      %s26 = sphi 0, %s24
      %s27 = sphi 0, %s25
      %s28 = sphi 0, %s26
      %s29 = sphi 0, %s27
      %s41 = sphi 0, %s43
      %s44 = sphi 0, %s41
      %s45 = sphi 0, %s44
      %s61 = sphi 0, %s45
      %s65 = sphi 0, %s65
      %s67 = sphi 0, %s65
      %s68 = sphi 0, %s67
      %s82 = sphi 0, %s68
      %s86 = sphi 0, %s86
      %s88 = sphi 0, %s86
      %s89 = sphi 0, %s88
      %s103 = sphi 0, %s89
      %s107 = sphi 0, %s107
      %s109 = sphi 0, %s107
      %s110 = sphi 0, %s109
      %s124 = sphi 0, %s110
      %s132 = sphi 0, %s134
      %s135 = sphi 0, %s132
      %s136 = sphi 0, %s135
      %s152 = sphi 0, %s136
    $region4: #{tpu_custom_call.1} parent=1 // loop_header_branch
      %20 = sbr.rel (%p18) target = $region8
    $region5: #{tpu_custom_call.1} parent=1 // loop_body
      %s22 = ssub.s32 %s17, 1
      %s23 = ssub.s32 %s17, 2
      %s30 = sadd.s32 1, %s25
      %p31 = scmp.ge.s32.totalorder %s30, 2
      %s32 = scalar_select %p31, 0, %s30
      %s33 = sadd.s32 1, %s24
      %s34 = scalar_select %p31, %s33, %s24
      %p35 = scmp.ge.s32.totalorder %s34, 2
      %s36 = scalar_select %p35, 0, %s34
      %s37 = ssub.s32 %s24, %s36
      %s38 = ssub.s32 %s25, %s32
      %s39 = sor.u32 %s37, %s38
      %p40 = scmp.eq.s32.totalorder %s39, 0
      %s42 = sadd.s32 %s41, 1
      %s43 = scalar_select %p40, %s41, %s42
      %p46 = pneg %p40
      %p47 = scmp.eq.s32.totalorder %s17, 3
      %p48 = por %p46, %p47
      %p49 = scmp.ne.s32.totalorder %s41, %s44
      %p50 = scmp.eq.s32.totalorder %s17, 0
      %p51 = por %p49, %p50
      %p52 = scmp.ne.s32.totalorder %s41, %s44
      %p53 = scmp.eq.s32.totalorder %s22, 3
      %p54 = por %p52, %p53
      %p55 = scmp.ne.s32.totalorder %s44, %s45
      %p56 = scmp.eq.s32.totalorder %s22, 0
      %p57 = por %p55, %p56
      %p58 = scmp.ne.s32.totalorder %s44, %s45
      %p59 = scmp.eq.s32.totalorder %s23, 3
      %p60 = por %p58, %p59
      %p62 = scmp.ne.s32.totalorder %s45, %s61
      %p63 = scmp.eq.s32.totalorder %s23, 0
      %p64 = por %p62, %p63
      %s66 = sadd.s32 %s65, 1
      %p69 = scmp.eq.s32.totalorder %s17, 3
      %p70 = scmp.ne.s32.totalorder %s65, %s67
      %p71 = scmp.eq.s32.totalorder %s17, 0
      %p72 = por %p70, %p71
      %p73 = scmp.ne.s32.totalorder %s65, %s67
      %p74 = scmp.eq.s32.totalorder %s22, 3
      %p75 = por %p73, %p74
      %p76 = scmp.ne.s32.totalorder %s67, %s68
      %p77 = scmp.eq.s32.totalorder %s22, 0
      %p78 = por %p76, %p77
      %p79 = scmp.ne.s32.totalorder %s67, %s68
      %p80 = scmp.eq.s32.totalorder %s23, 3
      %p81 = por %p79, %p80
      %p83 = scmp.ne.s32.totalorder %s68, %s82
      %p84 = scmp.eq.s32.totalorder %s23, 0
      %p85 = por %p83, %p84
      %s87 = sadd.s32 %s86, 1
      %p90 = scmp.eq.s32.totalorder %s17, 3
      %p91 = scmp.ne.s32.totalorder %s86, %s88
      %p92 = scmp.eq.s32.totalorder %s17, 0
      %p93 = por %p91, %p92
      %p94 = scmp.ne.s32.totalorder %s86, %s88
      %p95 = scmp.eq.s32.totalorder %s22, 3
      %p96 = por %p94, %p95
      %p97 = scmp.ne.s32.totalorder %s88, %s89
      %p98 = scmp.eq.s32.totalorder %s22, 0
      %p99 = por %p97, %p98
      %p100 = scmp.ne.s32.totalorder %s88, %s89
      %p101 = scmp.eq.s32.totalorder %s23, 3
      %p102 = por %p100, %p101
      %p104 = scmp.ne.s32.totalorder %s89, %s103
      %p105 = scmp.eq.s32.totalorder %s23, 0
      %p106 = por %p104, %p105
      %s108 = sadd.s32 %s107, 1
      %p111 = scmp.eq.s32.totalorder %s17, 3
      %p112 = scmp.ne.s32.totalorder %s107, %s109
      %p113 = scmp.eq.s32.totalorder %s17, 0
      %p114 = por %p112, %p113
      %p115 = scmp.ne.s32.totalorder %s107, %s109
      %p116 = scmp.eq.s32.totalorder %s22, 3
      %p117 = por %p115, %p116
      %p118 = scmp.ne.s32.totalorder %s109, %s110
      %p119 = scmp.eq.s32.totalorder %s22, 0
      %p120 = por %p118, %p119
      %p121 = scmp.ne.s32.totalorder %s109, %s110
      %p122 = scmp.eq.s32.totalorder %s23, 3
      %p123 = por %p121, %p122
      %p125 = scmp.ne.s32.totalorder %s110, %s124
      %p126 = scmp.eq.s32.totalorder %s23, 0
      %p127 = por %p125, %p126
      %s128 = ssub.s32 %s24, %s36
      %s129 = ssub.s32 %s25, %s32
      %s130 = sor.u32 %s128, %s129
      %p131 = scmp.eq.s32.totalorder %s130, 0
      %s133 = sadd.s32 %s132, 1
      %s134 = scalar_select %p131, %s132, %s133
      %p137 = pneg %p131
      %p138 = scmp.eq.s32.totalorder %s17, 3
      %p139 = por %p137, %p138
      %p140 = scmp.ne.s32.totalorder %s132, %s135
      %p141 = scmp.eq.s32.totalorder %s17, 0
      %p142 = por %p140, %p141
      %p143 = scmp.ne.s32.totalorder %s132, %s135
      %p144 = scmp.eq.s32.totalorder %s22, 3
      %p145 = por %p143, %p144
      %p146 = scmp.ne.s32.totalorder %s135, %s136
      %p147 = scmp.eq.s32.totalorder %s22, 0
      %p148 = por %p146, %p147
      %p149 = scmp.ne.s32.totalorder %s135, %s136
      %p150 = scmp.eq.s32.totalorder %s23, 3
      %p151 = por %p149, %p150
      %p153 = scmp.ne.s32.totalorder %s136, %s152
      %p154 = scmp.eq.s32.totalorder %s23, 0
      %p155 = por %p153, %p154
      %p156 = scmp.le.s32.totalorder 1, %s17
      %p157 = scmp.lt.s32.totalorder %s17, 5
      %p158 = pnand %p156, %p157
      %p159 = pneg %p158
      // Predicated region
      $region9: #{tpu_custom_call.1} parent=5 // pred_check
        _
      $region10: #{tpu_custom_call.1} parent=5 // pred_check_branch
        %161 = sbr.rel (%p158) target = $region12
      $region11: #{tpu_custom_call.1} parent=5 // pred_region
        %s162 = ssub.s32 %s17, 1
        // Predicated region
        $region13: #{tpu_custom_call.1} parent=11 // pred_check
          %p163 = pneg %p78
        $region14: #{tpu_custom_call.1} parent=11 // pred_check_branch
          %165 = sbr.rel (%p163) target = $region16
        $region15: #{tpu_custom_call.1} parent=11 // pred_region
          _
        $region16: #{tpu_custom_call.1} parent=11 // pred_fallthru
          _
        // Predicated region
        $region17: #{tpu_custom_call.1} parent=11 // pred_check
          %p166 = pneg %p99
        $region18: #{tpu_custom_call.1} parent=11 // pred_check_branch
          %168 = sbr.rel (%p166) target = $region20
        $region19: #{tpu_custom_call.1} parent=11 // pred_region
          %s170 = ssub.s32 512, 512
          %171 = vsyncadd [#allocation6], %s170
          %s172 = sshll.u32 [#allocation5], 4
          %s173 = int_to_ptr.vmem [resolvable:$true] %s172
          %178 = dma.hbm_to_vmem [thread:$0]  %s2, 512, %s173, [#allocation6], 128, 128, 8
        $region20: #{tpu_custom_call.1} parent=11 // pred_fallthru
          _
        // Predicated region
        $region21: #{tpu_custom_call.1} parent=11 // pred_check
          %p179 = pneg %p120
        $region22: #{tpu_custom_call.1} parent=11 // pred_check_branch
          %181 = sbr.rel (%p179) target = $region24
        $region23: #{tpu_custom_call.1} parent=11 // pred_region
          _
        $region24: #{tpu_custom_call.1} parent=11 // pred_fallthru
          _
      $region12: #{tpu_custom_call.1} parent=5 // pred_fallthru
        _
      %p182 = scmp.lt.s32.totalorder %s17, 4
      // Predicated region
      $region25: #{tpu_custom_call.1} parent=5 // pred_check
        %p183 = pneg %p182
      $region26: #{tpu_custom_call.1} parent=5 // pred_check_branch
        %185 = sbr.rel (%p183) target = $region28
      $region27: #{tpu_custom_call.1} parent=5 // pred_region
        // Predicated region
        $region29: #{tpu_custom_call.1} parent=27 // pred_check
          %p186 = pneg %p51
        $region30: #{tpu_custom_call.1} parent=27 // pred_check_branch
          %188 = sbr.rel (%p186) target = $region32
        $region31: #{tpu_custom_call.1} parent=27 // pred_region
          %s189 = sand.u32 %s41, 1
          %s190 = scalar_lea.sflag [#allocation3], %s189
          %s191 = sand.u32 %s41, 1
          %s192 = smul.addr %s191, 32
          %s193 = scalar_lea.vmem [#allocation2], %s192
          %s195 = ssub.s32 512, 512
          %196 = vsyncadd %s190, %s195
          %s197 = smul.addr %s24, 8
          %s198 = sadd.s32 %s25, %s197
          %s199 = smul.addr %s198, 128
          %s200 = scalar_lea.hbm %s0, %s199
          %s201 = sshll.u32 %s193, 4
          %s202 = int_to_ptr.vmem [resolvable:$true] %s201
          %207 = dma.hbm_to_vmem [thread:$0]  %s200, 512, %s202, %s190, 256, 128, 8
        $region32: #{tpu_custom_call.1} parent=27 // pred_fallthru
          _
      $region28: #{tpu_custom_call.1} parent=5 // pred_fallthru
        _
      %p208 = scmp.le.s32.totalorder 1, %s17
      %p209 = scmp.lt.s32.totalorder %s17, 5
      %p210 = pnand %p208, %p209
      %p211 = pneg %p210
      // Predicated region
      $region33: #{tpu_custom_call.1} parent=5 // pred_check
        _
      $region34: #{tpu_custom_call.1} parent=5 // pred_check_branch
        %213 = sbr.rel (%p210) target = $region36
      $region35: #{tpu_custom_call.1} parent=5 // pred_region
        %s214 = ssub.s32 %s17, 1
        %s215 = sand.u32 %s44, 1
        %s216 = scalar_lea.sflag [#allocation3], %s215
        %s217 = sand.u32 %s44, 1
        %s218 = smul.addr %s217, 32
        %s219 = scalar_lea.vmem [#allocation2], %s218
        // Predicated region
        $region37: #{tpu_custom_call.1} parent=35 // pred_check
          %p220 = pneg %p57
        $region38: #{tpu_custom_call.1} parent=35 // pred_check_branch
          %222 = sbr.rel (%p220) target = $region40
        $region39: #{tpu_custom_call.1} parent=35 // pred_region
          %223 = dma.done %s216, 512
        $region40: #{tpu_custom_call.1} parent=35 // pred_fallthru
          _
        // Predicated region
        $region41: #{tpu_custom_call.1} parent=35 // pred_check
          %p224 = pneg %p99
        $region42: #{tpu_custom_call.1} parent=35 // pred_check_branch
          %226 = sbr.rel (%p224) target = $region44
        $region43: #{tpu_custom_call.1} parent=35 // pred_region
          %227 = dma.done [#allocation6], 512
        $region44: #{tpu_custom_call.1} parent=35 // pred_fallthru
          _
        %s228 = sand.u32 %s44, 1
        %s229 = scalar_lea.sflag [#allocation3], %s228
        %s230 = sand.u32 %s44, 1
        %s231 = smul.addr %s230, 32
        %s232 = scalar_lea.vmem [#allocation2], %s231
        %p233 = pneg %p57
        %p234 = pneg %p54
        %p235 = pneg %p78
        %p236 = pneg %p75
        %p237 = pneg %p99
        %p238 = pneg %p96
        %p239 = pneg %p120
        %p240 = pneg %p117
        %p241 = pneg %p148
        %p242 = pneg %p145
        %s243 = sand.u32 %s135, 1
        %s244 = scalar_lea.sflag [#allocation4], %s243
        %s245 = sand.u32 %s135, 1
        %s246 = smul.addr %s245, 32
        %s247 = scalar_lea.vmem [#allocation7], %s246
        %v248 = vld [vmem:[%s219] sm:$0xff]
        %v249 = vld [vmem:[%s219 + $0x8] sm:$0xff]
        %v250 = vld [vmem:[%s219 + $0x10] sm:$0xff]
        %v251 = vld [vmem:[%s219 + $0x18] sm:$0xff]
        %v252 = vld [vmem:[%s3] sm:$0xff]
        %v253 = vld [vmem:[%s3 + $0x8] sm:$0xff]
        %v254 = vld [vmem:[%s3 + $0x10] sm:$0xff]
        %v255 = vld [vmem:[%s3 + $0x18] sm:$0xff]
        %v256 = vld [vmem:[%s1] sm:$0xff]
        %v257 = vld [vmem:[%s1 + $0x8] sm:$0xff]
        %v258 = vld [vmem:[%s1 + $0x10] sm:$0xff]
        %v259 = vld [vmem:[%s1 + $0x18] sm:$0xff]
        %261 = vset.pattern.permute.xlu0 0
        %262 = vperm.xlu0 %261, %v252
        %v263 = vpop.permute.xlu0 %262
        %266 = vset.pattern.permute.xlu0 0
        %267 = vperm.xlu0 %266, %v253
        %v268 = vpop.permute.xlu0 %267
        %271 = vset.pattern.permute.xlu0 0
        %272 = vperm.xlu0 %271, %v254
        %v273 = vpop.permute.xlu0 %272
        %276 = vset.pattern.permute.xlu0 0
        %277 = vperm.xlu0 %276, %v255
        %v278 = vpop.permute.xlu0 %277
        %vm280 = vcmask 261120
        %v282 = vsel %vm280, %v256, 0
        %v285 = vsel %vm280, %v257, 0
        %v288 = vsel %vm280, %v258, 0
        %v291 = vsel %vm280, %v259, 0
        %293 = vmatprep.subr.mxu0 0.0
        %294 = vmatpush1.msra.mxu0 %v248
        %295 = vmatprep.subr.mxu0 0.0
        %296 = vmatpush1.msra.mxu0 %v249
        %297 = vmatprep.subr.mxu0 0.0
        %298 = vmatpush1.msra.mxu0 %v250
        %299 = vmatprep.subr.mxu0 0.0
        %300 = vmatpush1.msra.mxu0 %v251
        %301 = vmatprep.subr.mxu0 0.0
        %302 = vmatpush1.msra.mxu0 0.0
        %303 = vmatprep.subr.mxu0 0.0
        %304 = vmatpush1.msra.mxu0 0.0
        %305 = vmatprep.subr.mxu0 0.0
        %306 = vmatpush1.msra.mxu0 0.0
        %307 = vmatprep.subr.mxu0 0.0
        %308 = vmatpush1.msra.mxu0 0.0
        %309 = vmatprep.subr.mxu0 0.0
        %310 = vmatpush1.msra.mxu0 0.0
        %311 = vmatprep.subr.mxu0 0.0
        %312 = vmatpush1.msra.mxu0 0.0
        %313 = vmatprep.subr.mxu0 0.0
        %314 = vmatpush1.msra.mxu0 0.0
        %315 = vmatprep.subr.mxu0 0.0
        %316 = vmatpush1.msra.mxu0 0.0
        %317 = vmatprep.subr.mxu0 0.0
        %318 = vmatpush1.msra.mxu0 0.0
        %319 = vmatprep.subr.mxu0 0.0
        %320 = vmatpush1.msra.mxu0 0.0
        %321 = vmatprep.subr.mxu0 0.0
        %322 = vmatpush1.msra.mxu0 0.0
        %323 = vmatprep.subr.mxu0 0.0
        %324 = vmatpush1.msra.mxu0 0.0
        %325 = vmatprep.subr.mxu0 0.0
        %326 = vmatpush1.msra.mxu0 0.0
        %327 = vmatprep.subr.mxu0 0.0
        %328 = vmatpush1.msra.mxu0 0.0
        %329 = vmatprep.subr.mxu0 0.0
        %330 = vmatpush1.msra.mxu0 0.0
        %331 = vmatprep.subr.mxu0 0.0
        %332 = vmatpush1.msra.mxu0 0.0
        %333 = vmatprep.subr.mxu0 0.0
        %334 = vmatpush1.msra.mxu0 0.0
        %335 = vmatprep.subr.mxu0 0.0
        %336 = vmatpush1.msra.mxu0 0.0
        %337 = vmatprep.subr.mxu0 0.0
        %338 = vmatpush1.msra.mxu0 0.0
        %339 = vmatprep.subr.mxu0 0.0
        %340 = vmatpush1.msra.mxu0 0.0
        %341 = vmatprep.subr.mxu0 0.0
        %342 = vmatpush1.msra.mxu0 0.0
        %343 = vmatprep.subr.mxu0 0.0
        %344 = vmatpush1.msra.mxu0 0.0
        %345 = vmatprep.subr.mxu0 0.0
        %346 = vmatpush1.msra.mxu0 0.0
        %347 = vmatprep.subr.mxu0 0.0
        %348 = vmatpush1.msra.mxu0 0.0
        %349 = vmatprep.subr.mxu0 0.0
        %350 = vmatpush1.msra.mxu0 0.0
        %351 = vmatprep.subr.mxu0 0.0
        %352 = vmatpush1.msra.mxu0 0.0
        %353 = vmatprep.subr.mxu0 0.0
        %354 = vmatpush1.msra.mxu0 0.0
        %355 = vmatprep.subr.mxu0 0.0
        %356 = vmatpush1.msra.mxu0 0.0
        %357 = vmatprep.mubr.f32.mxu0 0.0
        %358 = vmatmul.mubr.f32.gmra.mrb[0].mxu0 %v282
        %v359 = vpop.f32.mrb[0].mxu0
        %v360 = vadd.f32 %v263, %v359
        %v361 = vpop.f32.mrb[0].mxu0
        %362 = vmatprep.mubr.f32.mxu0 0.0
        %363 = vmatmul.mubr.f32.gmra.mrb[0].mxu0 %v285
        %v364 = vpop.f32.mrb[0].mxu0
        %v365 = vadd.f32 %v268, %v364
        %v366 = vpop.f32.mrb[0].mxu0
        %367 = vmatprep.mubr.f32.mxu0 0.0
        %368 = vmatmul.mubr.f32.gmra.mrb[0].mxu0 %v288
        %v369 = vpop.f32.mrb[0].mxu0
        %v370 = vadd.f32 %v273, %v369
        %v371 = vpop.f32.mrb[0].mxu0
        %372 = vmatprep.mubr.f32.mxu0 0.0
        %373 = vmatmul.mubr.f32.gmra.mrb[0].mxu0 %v291
        %v374 = vpop.f32.mrb[0].mxu0
        %v375 = vadd.f32 %v278, %v374
        %v376 = vpop.f32.mrb[0].mxu0
        %377 = vdwg.mxu0
        %v378 = vmax.f32 %v360, 0.0
        %v379 = vmax.f32 %v365, 0.0
        %v380 = vmax.f32 %v370, 0.0
        %v381 = vmax.f32 %v375, 0.0
        %v382 = vld [vmem:[#allocation5] sm:$0xff]
        %v383 = vld [vmem:[#allocation5 + $0x8] sm:$0xff]
        %v384 = vld [vmem:[#allocation5 + $0x10] sm:$0xff]
        %v385 = vld [vmem:[#allocation5 + $0x18] sm:$0xff]
        %386 = vset.pattern.permute.xlu0 1
        %387 = vperm.xlu0 %386, %v252
        %v388 = vpop.permute.xlu0 %387
        %390 = vset.pattern.permute.xlu0 1
        %391 = vperm.xlu0 %390, %v253
        %v392 = vpop.permute.xlu0 %391
        %394 = vset.pattern.permute.xlu0 1
        %395 = vperm.xlu0 %394, %v254
        %v396 = vpop.permute.xlu0 %395
        %398 = vset.pattern.permute.xlu0 1
        %399 = vperm.xlu0 %398, %v255
        %v400 = vpop.permute.xlu0 %399
        %v403 = vsel %vm280, %v382, 0
        %v406 = vsel %vm280, %v383, 0
        %v409 = vsel %vm280, %v384, 0
        %v412 = vsel %vm280, %v385, 0
        %414 = vmatprep.subr.mxu0 0.0
        %415 = vmatpush1.msra.mxu0 %v378
        %416 = vmatprep.subr.mxu0 0.0
        %417 = vmatpush1.msra.mxu0 %v379
        %418 = vmatprep.subr.mxu0 0.0
        %419 = vmatpush1.msra.mxu0 %v380
        %420 = vmatprep.subr.mxu0 0.0
        %421 = vmatpush1.msra.mxu0 %v381
        %422 = vmatprep.subr.mxu0 0.0
        %423 = vmatpush1.msra.mxu0 0.0
        %424 = vmatprep.subr.mxu0 0.0
        %425 = vmatpush1.msra.mxu0 0.0
        %426 = vmatprep.subr.mxu0 0.0
        %427 = vmatpush1.msra.mxu0 0.0
        %428 = vmatprep.subr.mxu0 0.0
        %429 = vmatpush1.msra.mxu0 0.0
        %430 = vmatprep.subr.mxu0 0.0
        %431 = vmatpush1.msra.mxu0 0.0
        %432 = vmatprep.subr.mxu0 0.0
        %433 = vmatpush1.msra.mxu0 0.0
        %434 = vmatprep.subr.mxu0 0.0
        %435 = vmatpush1.msra.mxu0 0.0
        %436 = vmatprep.subr.mxu0 0.0
        %437 = vmatpush1.msra.mxu0 0.0
        %438 = vmatprep.subr.mxu0 0.0
        %439 = vmatpush1.msra.mxu0 0.0
        %440 = vmatprep.subr.mxu0 0.0
        %441 = vmatpush1.msra.mxu0 0.0
        %442 = vmatprep.subr.mxu0 0.0
        %443 = vmatpush1.msra.mxu0 0.0
        %444 = vmatprep.subr.mxu0 0.0
        %445 = vmatpush1.msra.mxu0 0.0
        %446 = vmatprep.subr.mxu0 0.0
        %447 = vmatpush1.msra.mxu0 0.0
        %448 = vmatprep.subr.mxu0 0.0
        %449 = vmatpush1.msra.mxu0 0.0
        %450 = vmatprep.subr.mxu0 0.0
        %451 = vmatpush1.msra.mxu0 0.0
        %452 = vmatprep.subr.mxu0 0.0
        %453 = vmatpush1.msra.mxu0 0.0
        %454 = vmatprep.subr.mxu0 0.0
        %455 = vmatpush1.msra.mxu0 0.0
        %456 = vmatprep.subr.mxu0 0.0
        %457 = vmatpush1.msra.mxu0 0.0
        %458 = vmatprep.subr.mxu0 0.0
        %459 = vmatpush1.msra.mxu0 0.0
        %460 = vmatprep.subr.mxu0 0.0
        %461 = vmatpush1.msra.mxu0 0.0
        %462 = vmatprep.subr.mxu0 0.0
        %463 = vmatpush1.msra.mxu0 0.0
        %464 = vmatprep.subr.mxu0 0.0
        %465 = vmatpush1.msra.mxu0 0.0
        %466 = vmatprep.subr.mxu0 0.0
        %467 = vmatpush1.msra.mxu0 0.0
        %468 = vmatprep.subr.mxu0 0.0
        %469 = vmatpush1.msra.mxu0 0.0
        %470 = vmatprep.subr.mxu0 0.0
        %471 = vmatpush1.msra.mxu0 0.0
        %472 = vmatprep.subr.mxu0 0.0
        %473 = vmatpush1.msra.mxu0 0.0
        %474 = vmatprep.subr.mxu0 0.0
        %475 = vmatpush1.msra.mxu0 0.0
        %476 = vmatprep.subr.mxu0 0.0
        %477 = vmatpush1.msra.mxu0 0.0
        %478 = vmatprep.mubr.f32.mxu0 0.0
        %479 = vmatmul.mubr.f32.gmra.mrb[0].mxu0 %v403
        %v480 = vpop.f32.mrb[0].mxu0
        %v481 = vadd.f32 %v388, %v480
        %v482 = vpop.f32.mrb[0].mxu0
        %483 = vmatprep.mubr.f32.mxu0 0.0
        %484 = vmatmul.mubr.f32.gmra.mrb[0].mxu0 %v406
        %v485 = vpop.f32.mrb[0].mxu0
        %v486 = vadd.f32 %v392, %v485
        %v487 = vpop.f32.mrb[0].mxu0
        %488 = vmatprep.mubr.f32.mxu0 0.0
        %489 = vmatmul.mubr.f32.gmra.mrb[0].mxu0 %v409
        %v490 = vpop.f32.mrb[0].mxu0
        %v491 = vadd.f32 %v396, %v490
        %v492 = vpop.f32.mrb[0].mxu0
        %493 = vmatprep.mubr.f32.mxu0 0.0
        %494 = vmatmul.mubr.f32.gmra.mrb[0].mxu0 %v412
        %v495 = vpop.f32.mrb[0].mxu0
        %v496 = vadd.f32 %v400, %v495
        %v497 = vpop.f32.mrb[0].mxu0
        %498 = vdwg.mxu0
        %v499 = vadd.f32 %v481, %v248
        %v500 = vadd.f32 %v486, %v249
        %v501 = vadd.f32 %v491, %v250
        %v502 = vadd.f32 %v496, %v251
        %v503 = vadd.f32 %v499, %v500
        %v504 = vadd.f32 %v503, %v501
        %v505 = vadd.f32 %v504, %v502
        %v506 = vrot.slane %v505, 4
        %v507 = vadd.f32 %v505, %v506
        %v508 = vrot.slane %v507, 2
        %v509 = vadd.f32 %v507, %v508
        %v510 = vrot.slane %v509, 1
        %v511 = vadd.f32 %v509, %v510
        %v512 = vmul.f32 %v511, 0.03125
        %v513 = vsub.f32 %v499, %v512
        %v514 = vsub.f32 %v500, %v512
        %v515 = vsub.f32 %v501, %v512
        %v516 = vsub.f32 %v502, %v512
        %v517 = vmul.f32 %v513, %v513
        %v518 = vmul.f32 %v514, %v514
        %v519 = vmul.f32 %v515, %v515
        %v520 = vmul.f32 %v516, %v516
        %v521 = vadd.f32 %v517, %v518
        %v522 = vadd.f32 %v521, %v519
        %v523 = vadd.f32 %v522, %v520
        %v524 = vrot.slane %v523, 4
        %v525 = vadd.f32 %v523, %v524
        %v526 = vrot.slane %v525, 2
        %v527 = vadd.f32 %v525, %v526
        %v528 = vrot.slane %v527, 1
        %v529 = vadd.f32 %v527, %v528
        %v530 = vmul.f32 %v529, 0.03125
        %v531 = vadd.f32 %v530, 1e-05
        %v532 = vrsqrt.pop %v531
        %v533 = vmul.f32 %v513, %v532
        %v534 = vmul.f32 %v514, %v532
        %v535 = vmul.f32 %v515, %v532
        %v536 = vmul.f32 %v516, %v532
        %537 = vset.pattern.permute.xlu0 2
        %538 = vperm.xlu0 %537, %v252
        %v539 = vpop.permute.xlu0 %538
        %541 = vset.pattern.permute.xlu0 2
        %542 = vperm.xlu0 %541, %v253
        %v543 = vpop.permute.xlu0 %542
        %545 = vset.pattern.permute.xlu0 2
        %546 = vperm.xlu0 %545, %v254
        %v547 = vpop.permute.xlu0 %546
        %549 = vset.pattern.permute.xlu0 2
        %550 = vperm.xlu0 %549, %v255
        %v551 = vpop.permute.xlu0 %550
        %v553 = vmul.f32 %v533, %v539
        %v554 = vmul.f32 %v534, %v543
        %v555 = vmul.f32 %v535, %v547
        %v556 = vmul.f32 %v536, %v551
        %557 = vset.pattern.permute.xlu0 3
        %558 = vperm.xlu0 %557, %v252
        %v559 = vpop.permute.xlu0 %558
        %561 = vset.pattern.permute.xlu0 3
        %562 = vperm.xlu0 %561, %v253
        %v563 = vpop.permute.xlu0 %562
        %565 = vset.pattern.permute.xlu0 3
        %566 = vperm.xlu0 %565, %v254
        %v567 = vpop.permute.xlu0 %566
        %569 = vset.pattern.permute.xlu0 3
        %570 = vperm.xlu0 %569, %v255
        %v571 = vpop.permute.xlu0 %570
        %v573 = vadd.f32 %v553, %v559
        %v574 = vadd.f32 %v554, %v563
        %v575 = vadd.f32 %v555, %v567
        %v576 = vadd.f32 %v556, %v571
        %577 = vst [vmem:[%s247] sm:$0xff] %v573
        %578 = vst [vmem:[%s247 + $0x8] sm:$0xff] %v574
        %579 = vst [vmem:[%s247 + $0x10] sm:$0xff] %v575
        %580 = vst [vmem:[%s247 + $0x18] sm:$0xff] %v576
        %s581 = sand.u32 %s135, 1
        %s582 = scalar_lea.sflag [#allocation4], %s581
        %s583 = sand.u32 %s135, 1
        %s584 = smul.addr %s583, 32
        %s585 = scalar_lea.vmem [#allocation7], %s584
        // Predicated region
        $region45: #{tpu_custom_call.1} parent=35 // pred_check
          %p586 = pneg %p145
        $region46: #{tpu_custom_call.1} parent=35 // pred_check_branch
          %588 = sbr.rel (%p586) target = $region48
        $region47: #{tpu_custom_call.1} parent=35 // pred_region
          %s590 = ssub.s32 512, 512
          %591 = vsyncadd %s582, %s590
          %s592 = smul.addr %s26, 8
          %s593 = sadd.s32 %s27, %s592
          %s594 = smul.addr %s593, 128
          %s595 = scalar_lea.hbm %s4, %s594
          %s596 = sshll.u32 %s585, 4
          %s597 = int_to_ptr.vmem [resolvable:$true] %s596
          %602 = dma.vmem_to_hbm [thread:$0]  %s597, 512, %s595, %s582, 128, 256, 8
        $region48: #{tpu_custom_call.1} parent=35 // pred_fallthru
          _
      $region36: #{tpu_custom_call.1} parent=5 // pred_fallthru
        _
      %p603 = scmp.le.s32.totalorder 2, %s17
      // Predicated region
      $region49: #{tpu_custom_call.1} parent=5 // pred_check
        %p604 = pneg %p603
      $region50: #{tpu_custom_call.1} parent=5 // pred_check_branch
        %606 = sbr.rel (%p604) target = $region52
      $region51: #{tpu_custom_call.1} parent=5 // pred_region
        %s607 = ssub.s32 %s17, 2
        // Predicated region
        $region53: #{tpu_custom_call.1} parent=51 // pred_check
          %p608 = pneg %p151
        $region54: #{tpu_custom_call.1} parent=51 // pred_check_branch
          %610 = sbr.rel (%p608) target = $region56
        $region55: #{tpu_custom_call.1} parent=51 // pred_region
          %s611 = sand.u32 %s136, 1
          %s612 = scalar_lea.sflag [#allocation4], %s611
          %s613 = sand.u32 %s136, 1
          %s614 = smul.addr %s613, 32
          %s615 = scalar_lea.vmem [#allocation7], %s614
          %616 = dma.done %s612, 512
        $region56: #{tpu_custom_call.1} parent=51 // pred_fallthru
          _
      $region52: #{tpu_custom_call.1} parent=5 // pred_fallthru
        _
    $region6: #{tpu_custom_call.1} parent=1 // loop_footer
      %s21 = sadd.s32 1, %s17
    $region7: #{tpu_custom_call.1} parent=1 // loop_footer_branch
      %16 = sbr.rel target = $region3
    $region8: #{tpu_custom_call.1} parent=1 // loop_exit
      _
    %617 = vsyncpa [#allocation3], 1
    %s618 = scalar_lea.sflag [#allocation3], 1
    %619 = vsyncpa %s618, 1
    %620 = vsyncpa [#allocation6], 1
    %621 = vsyncpa [#allocation4], 1
    %s622 = scalar_lea.sflag [#allocation4], 1
    %623 = vsyncpa %s622, 1

// kernel: tpu_custom_call.1
$region0: #{tpu_custom_call.1}
  #allocation0 [shape = 'u32[]', space=smem, size = 0x4, offset = 0x4, fixed_abs, tag = 'smem constant byte address 0x4 - core index']
  #allocation1 [shape = 'u32[144,128]{1,0:T(1,128)}', space=vmem, size = 0x12000, scoped, tag = 'internal scratch']
  %s0 = inlined_call_operand.hbm [shape: f32[2,32,200], index: 0, kind: input, shape index: {}]
  %s1 = inlined_call_operand.vmem [shape: f32[32,32], index: 1, kind: input, shape index: {}]
  %s2 = inlined_call_operand.hbm [shape: f32[32,32], index: 2, kind: input, shape index: {}]
  %s3 = inlined_call_operand.vmem [shape: f32[32,4], index: 3, kind: input, shape index: {}]
  %s4 = inlined_call_operand.hbm [shape: f32[2,32,200], index: 4, kind: output, shape index: {}]
  %s5 = sld [smem:[#allocation0]]
  $region57: #{tpu_custom_call.1} parent=0
    _
  %s7 = ssub.s32 1, %s5
  %s8 = scalar_select 0, %s7, %s5
  $region1: #{tpu_custom_call.1} parent=0
    #allocation2 [shape = 'u8[32768]{0}', space=vmem, size = 0x8000, scoped, tag = 'input window, operand 0']
    #allocation3 [shape = 's32[2]{0}', space=sflag, size = 0x8, scoped, tag = 'scoped memory for tpu_custom_call.1']
    #allocation4 [shape = 's32[2]{0}', space=sflag, size = 0x8, scoped, tag = 'scoped memory for tpu_custom_call.1']
    #allocation5 [shape = 'u8[16384]{0}', space=vmem, size = 0x4000, scoped, tag = 'input window, operand 2, single buffered']
    #allocation6 [shape = 's32[1]{0}', space=sflag, size = 0x4, scoped, tag = 'scoped memory for tpu_custom_call.1']
    #allocation7 [shape = 'u8[32768]{0}', space=vmem, size = 0x8000, scoped, tag = 'output window, operand 0']
    %9 = vsyncpa [#allocation3], 0
    %s10 = scalar_lea.sflag [#allocation3], 1
    %11 = vsyncpa %s10, 0
    %12 = vsyncpa [#allocation6], 0
    %13 = vsyncpa [#allocation4], 0
    %s14 = scalar_lea.sflag [#allocation4], 1
    %15 = vsyncpa %s14, 0
    loop: start=0, step=1, limit=6
    $region2: #{tpu_custom_call.1} parent=1 // loop_pre_header
      _
    $region3: #{tpu_custom_call.1} parent=1 // loop_header
      %s17 = sphi 0, %s21
      %p18 = scmp.ge.s32.totalorder %s17, 6
      %s24 = sphi 0, %s36
      %s25 = sphi 0, %s32
      %s26 = sphi 0, %s24
      %s27 = sphi 0, %s25
      %s28 = sphi 0, %s26
      %s29 = sphi 0, %s27
      %s41 = sphi 0, %s43
      %s44 = sphi 0, %s41
      %s45 = sphi 0, %s44
      %s61 = sphi 0, %s45
      %s65 = sphi 0, %s65
      %s67 = sphi 0, %s65
      %s68 = sphi 0, %s67
      %s82 = sphi 0, %s68
      %s86 = sphi 0, %s86
      %s88 = sphi 0, %s86
      %s89 = sphi 0, %s88
      %s103 = sphi 0, %s89
      %s107 = sphi 0, %s107
      %s109 = sphi 0, %s107
      %s110 = sphi 0, %s109
      %s124 = sphi 0, %s110
      %s132 = sphi 0, %s134
      %s135 = sphi 0, %s132
      %s136 = sphi 0, %s135
      %s152 = sphi 0, %s136
    $region4: #{tpu_custom_call.1} parent=1 // loop_header_branch
      %20 = sbr.rel (%p18) target = $region8
    $region5: #{tpu_custom_call.1} parent=1 // loop_body
      %s22 = ssub.s32 %s17, 1
      %s23 = ssub.s32 %s17, 2
      %s30 = sadd.s32 1, %s25
      %p31 = scmp.ge.s32.totalorder %s30, 2
      %s32 = scalar_select %p31, 0, %s30
      %s33 = sadd.s32 1, %s24
      %s34 = scalar_select %p31, %s33, %s24
      %p35 = scmp.ge.s32.totalorder %s34, 2
      %s36 = scalar_select %p35, 0, %s34
      %s37 = ssub.s32 %s24, %s36
      %s38 = ssub.s32 %s25, %s32
      %s39 = sor.u32 %s37, %s38
      %p40 = scmp.eq.s32.totalorder %s39, 0
      %s42 = sadd.s32 %s41, 1
      %s43 = scalar_select %p40, %s41, %s42
      %p46 = pneg %p40
      %p47 = scmp.eq.s32.totalorder %s17, 3
      %p48 = por %p46, %p47
      %p49 = scmp.ne.s32.totalorder %s41, %s44
      %p50 = scmp.eq.s32.totalorder %s17, 0
      %p51 = por %p49, %p50
      %p52 = scmp.ne.s32.totalorder %s41, %s44
      %p53 = scmp.eq.s32.totalorder %s22, 3
      %p54 = por %p52, %p53
      %p55 = scmp.ne.s32.totalorder %s44, %s45
      %p56 = scmp.eq.s32.totalorder %s22, 0
      %p57 = por %p55, %p56
      %p58 = scmp.ne.s32.totalorder %s44, %s45
      %p59 = scmp.eq.s32.totalorder %s23, 3
      %p60 = por %p58, %p59
      %p62 = scmp.ne.s32.totalorder %s45, %s61
      %p63 = scmp.eq.s32.totalorder %s23, 0
      %p64 = por %p62, %p63
      %s66 = sadd.s32 %s65, 1
      %p69 = scmp.eq.s32.totalorder %s17, 3
      %p70 = scmp.ne.s32.totalorder %s65, %s67
      %p71 = scmp.eq.s32.totalorder %s17, 0
      %p72 = por %p70, %p71
      %p73 = scmp.ne.s32.totalorder %s65, %s67
      %p74 = scmp.eq.s32.totalorder %s22, 3
      %p75 = por %p73, %p74
      %p76 = scmp.ne.s32.totalorder %s67, %s68
      %p77 = scmp.eq.s32.totalorder %s22, 0
      %p78 = por %p76, %p77
      %p79 = scmp.ne.s32.totalorder %s67, %s68
      %p80 = scmp.eq.s32.totalorder %s23, 3
      %p81 = por %p79, %p80
      %p83 = scmp.ne.s32.totalorder %s68, %s82
      %p84 = scmp.eq.s32.totalorder %s23, 0
      %p85 = por %p83, %p84
      %s87 = sadd.s32 %s86, 1
      %p90 = scmp.eq.s32.totalorder %s17, 3
      %p91 = scmp.ne.s32.totalorder %s86, %s88
      %p92 = scmp.eq.s32.totalorder %s17, 0
      %p93 = por %p91, %p92
      %p94 = scmp.ne.s32.totalorder %s86, %s88
      %p95 = scmp.eq.s32.totalorder %s22, 3
      %p96 = por %p94, %p95
      %p97 = scmp.ne.s32.totalorder %s88, %s89
      %p98 = scmp.eq.s32.totalorder %s22, 0
      %p99 = por %p97, %p98
      %p100 = scmp.ne.s32.totalorder %s88, %s89
      %p101 = scmp.eq.s32.totalorder %s23, 3
      %p102 = por %p100, %p101
      %p104 = scmp.ne.s32.totalorder %s89, %s103
      %p105 = scmp.eq.s32.totalorder %s23, 0
      %p106 = por %p104, %p105
      %s108 = sadd.s32 %s107, 1
      %p111 = scmp.eq.s32.totalorder %s17, 3
      %p112 = scmp.ne.s32.totalorder %s107, %s109
      %p113 = scmp.eq.s32.totalorder %s17, 0
      %p114 = por %p112, %p113
      %p115 = scmp.ne.s32.totalorder %s107, %s109
      %p116 = scmp.eq.s32.totalorder %s22, 3
      %p117 = por %p115, %p116
      %p118 = scmp.ne.s32.totalorder %s109, %s110
      %p119 = scmp.eq.s32.totalorder %s22, 0
      %p120 = por %p118, %p119
      %p121 = scmp.ne.s32.totalorder %s109, %s110
      %p122 = scmp.eq.s32.totalorder %s23, 3
      %p123 = por %p121, %p122
      %p125 = scmp.ne.s32.totalorder %s110, %s124
      %p126 = scmp.eq.s32.totalorder %s23, 0
      %p127 = por %p125, %p126
      %s128 = ssub.s32 %s24, %s36
      %s129 = ssub.s32 %s25, %s32
      %s130 = sor.u32 %s128, %s129
      %p131 = scmp.eq.s32.totalorder %s130, 0
      %s133 = sadd.s32 %s132, 1
      %s134 = scalar_select %p131, %s132, %s133
      %p137 = pneg %p131
      %p138 = scmp.eq.s32.totalorder %s17, 3
      %p139 = por %p137, %p138
      %p140 = scmp.ne.s32.totalorder %s132, %s135
      %p141 = scmp.eq.s32.totalorder %s17, 0
      %p142 = por %p140, %p141
      %p143 = scmp.ne.s32.totalorder %s132, %s135
      %p144 = scmp.eq.s32.totalorder %s22, 3
      %p145 = por %p143, %p144
      %p146 = scmp.ne.s32.totalorder %s135, %s136
      %p147 = scmp.eq.s32.totalorder %s22, 0
      %p148 = por %p146, %p147
      %p149 = scmp.ne.s32.totalorder %s135, %s136
      %p150 = scmp.eq.s32.totalorder %s23, 3
      %p151 = por %p149, %p150
      %p153 = scmp.ne.s32.totalorder %s136, %s152
      %p154 = scmp.eq.s32.totalorder %s23, 0
      %p155 = por %p153, %p154
      %p156 = scmp.le.s32.totalorder 1, %s17
      %p157 = scmp.lt.s32.totalorder %s17, 5
      %p158 = pnand %p156, %p157
      %p159 = pneg %p158
      // Predicated region
      $region9: #{tpu_custom_call.1} parent=5 // pred_check
        _
      $region10: #{tpu_custom_call.1} parent=5 // pred_check_branch
        %161 = sbr.rel (%p158) target = $region12
      $region11: #{tpu_custom_call.1} parent=5 // pred_region
        %s162 = ssub.s32 %s17, 1
        // Predicated region
        $region13: #{tpu_custom_call.1} parent=11 // pred_check
          %p163 = pneg %p78
        $region14: #{tpu_custom_call.1} parent=11 // pred_check_branch
          %165 = sbr.rel (%p163) target = $region16
        $region15: #{tpu_custom_call.1} parent=11 // pred_region
          _
        $region16: #{tpu_custom_call.1} parent=11 // pred_fallthru
          _
        // Predicated region
        $region17: #{tpu_custom_call.1} parent=11 // pred_check
          %p166 = pneg %p99
        $region18: #{tpu_custom_call.1} parent=11 // pred_check_branch
          %168 = sbr.rel (%p166) target = $region20
        $region19: #{tpu_custom_call.1} parent=11 // pred_region
          %s170 = ssub.s32 512, 512
          %171 = vsyncadd [#allocation6], %s170
          %s172 = sshll.u32 [#allocation5], 4
          %s173 = int_to_ptr.vmem [resolvable:$true] %s172
          %178 = dma.hbm_to_vmem [thread:$0]  %s2, 512, %s173, [#allocation6], 128, 128, 8
        $region20: #{tpu_custom_call.1} parent=11 // pred_fallthru
          _
        // Predicated region
        $region21: #{tpu_custom_call.1} parent=11 // pred_check
          %p179 = pneg %p120
        $region22: #{tpu_custom_call.1} parent=11 // pred_check_branch
          %181 = sbr.rel (%p179) target = $region24
        $region23: #{tpu_custom_call.1} parent=11 // pred_region
          _
        $region24: #{tpu_custom_call.1} parent=11 // pred_fallthru
          _
      $region12: #{tpu_custom_call.1} parent=5 // pred_fallthru
        _
      %p182 = scmp.lt.s32.totalorder %s17, 4
      // Predicated region
      $region25: #{tpu_custom_call.1} parent=5 // pred_check
        %p183 = pneg %p182
      $region26: #{tpu_custom_call.1} parent=5 // pred_check_branch
        %185 = sbr.rel (%p183) target = $region28
      $region27: #{tpu_custom_call.1} parent=5 // pred_region
        // Predicated region
        $region29: #{tpu_custom_call.1} parent=27 // pred_check
          %p186 = pneg %p51
        $region30: #{tpu_custom_call.1} parent=27 // pred_check_branch
          %188 = sbr.rel (%p186) target = $region32
        $region31: #{tpu_custom_call.1} parent=27 // pred_region
          %s189 = sand.u32 %s41, 1
          %s190 = scalar_lea.sflag [#allocation3], %s189
          %s191 = sand.u32 %s41, 1
          %s192 = smul.addr %s191, 32
          %s193 = scalar_lea.vmem [#allocation2], %s192
          %s195 = ssub.s32 512, 512
          %196 = vsyncadd %s190, %s195
          %s197 = smul.addr %s24, 8
          %s198 = sadd.s32 %s25, %s197
          %s199 = smul.addr %s198, 128
          %s200 = scalar_lea.hbm %s0, %s199
          %s201 = sshll.u32 %s193, 4
          %s202 = int_to_ptr.vmem [resolvable:$true] %s201
          %207 = dma.hbm_to_vmem [thread:$0]  %s200, 512, %s202, %s190, 256, 128, 8
        $region32: #{tpu_custom_call.1} parent=27 // pred_fallthru
          _
      $region28: #{tpu_custom_call.1} parent=5 // pred_fallthru
        _
      %p208 = scmp.le.s32.totalorder 1, %s17
      %p209 = scmp.lt.s32.totalorder %s17, 5
      %p210 = pnand %p208, %p209
      %p211 = pneg %p210
      // Predicated region
      $region33: #{tpu_custom_call.1} parent=5 // pred_check
        _
      $region34: #{tpu_custom_call.1} parent=5 // pred_check_branch
        %213 = sbr.rel (%p210) target = $region36
      $region35: #{tpu_custom_call.1} parent=5 // pred_region
        %s214 = ssub.s32 %s17, 1
        %s215 = sand.u32 %s44, 1
        %s216 = scalar_lea.sflag [#allocation3], %s215
        %s217 = sand.u32 %s44, 1
        %s218 = smul.addr %s217, 32
        %s219 = scalar_lea.vmem [#allocation2], %s218
        // Predicated region
        $region37: #{tpu_custom_call.1} parent=35 // pred_check
          %p220 = pneg %p57
        $region38: #{tpu_custom_call.1} parent=35 // pred_check_branch
          %222 = sbr.rel (%p220) target = $region40
        $region39: #{tpu_custom_call.1} parent=35 // pred_region
          %223 = dma.done %s216, 512
        $region40: #{tpu_custom_call.1} parent=35 // pred_fallthru
          _
        // Predicated region
        $region41: #{tpu_custom_call.1} parent=35 // pred_check
          %p224 = pneg %p99
        $region42: #{tpu_custom_call.1} parent=35 // pred_check_branch
          %226 = sbr.rel (%p224) target = $region44
        $region43: #{tpu_custom_call.1} parent=35 // pred_region
          %227 = dma.done [#allocation6], 512
        $region44: #{tpu_custom_call.1} parent=35 // pred_fallthru
          _
        %s228 = sand.u32 %s44, 1
        %s229 = scalar_lea.sflag [#allocation3], %s228
        %s230 = sand.u32 %s44, 1
        %s231 = smul.addr %s230, 32
        %s232 = scalar_lea.vmem [#allocation2], %s231
        %p233 = pneg %p57
        %p234 = pneg %p54
        %p235 = pneg %p78
        %p236 = pneg %p75
        %p237 = pneg %p99
        %p238 = pneg %p96
        %p239 = pneg %p120
        %p240 = pneg %p117
        %p241 = pneg %p148
        %p242 = pneg %p145
        %s243 = sand.u32 %s135, 1
        %s244 = scalar_lea.sflag [#allocation4], %s243
        %s245 = sand.u32 %s135, 1
        %s246 = smul.addr %s245, 32
        %s247 = scalar_lea.vmem [#allocation7], %s246
        %v248 = vld [vmem:[%s219] sm:$0xff]
        %v249 = vld [vmem:[%s219 + $0x8] sm:$0xff]
        %v250 = vld [vmem:[%s219 + $0x10] sm:$0xff]
        %v251 = vld [vmem:[%s219 + $0x18] sm:$0xff]
        %v252 = vld [vmem:[%s3] sm:$0xff]
        %v253 = vld [vmem:[%s3 + $0x8] sm:$0xff]
        %v254 = vld [vmem:[%s3 + $0x10] sm:$0xff]
        %v255 = vld [vmem:[%s3 + $0x18] sm:$0xff]
        %v256 = vld [vmem:[%s1] sm:$0xff]
        %v257 = vld [vmem:[%s1 + $0x8] sm:$0xff]
        %v258 = vld [vmem:[%s1 + $0x10] sm:$0xff]
        %v259 = vld [vmem:[%s1 + $0x18] sm:$0xff]
        %261 = vset.pattern.permute.xlu0 0
        %262 = vperm.xlu0 %261, %v252
        %v263 = vpop.permute.xlu0 %262
        %266 = vset.pattern.permute.xlu0 0
        %267 = vperm.xlu0 %266, %v253
        %v268 = vpop.permute.xlu0 %267
        %271 = vset.pattern.permute.xlu0 0
        %272 = vperm.xlu0 %271, %v254
        %v273 = vpop.permute.xlu0 %272
        %276 = vset.pattern.permute.xlu0 0
        %277 = vperm.xlu0 %276, %v255
        %v278 = vpop.permute.xlu0 %277
        %vm280 = vcmask 261120
        %v282 = vsel %vm280, %v256, 0
        %v285 = vsel %vm280, %v257, 0
        %v288 = vsel %vm280, %v258, 0
        %v291 = vsel %vm280, %v259, 0
        %293 = vmatprep.subr.mxu0 0.0
        %294 = vmatpush1.msra.mxu0 %v248
        %295 = vmatprep.subr.mxu0 0.0
        %296 = vmatpush1.msra.mxu0 %v249
        %297 = vmatprep.subr.mxu0 0.0
        %298 = vmatpush1.msra.mxu0 %v250
        %299 = vmatprep.subr.mxu0 0.0
        %300 = vmatpush1.msra.mxu0 %v251
        %301 = vmatprep.subr.mxu0 0.0
        %302 = vmatpush1.msra.mxu0 0.0
        %303 = vmatprep.subr.mxu0 0.0
        %304 = vmatpush1.msra.mxu0 0.0
        %305 = vmatprep.subr.mxu0 0.0
        %306 = vmatpush1.msra.mxu0 0.0
        %307 = vmatprep.subr.mxu0 0.0
        %308 = vmatpush1.msra.mxu0 0.0
        %309 = vmatprep.subr.mxu0 0.0
        %310 = vmatpush1.msra.mxu0 0.0
        %311 = vmatprep.subr.mxu0 0.0
        %312 = vmatpush1.msra.mxu0 0.0
        %313 = vmatprep.subr.mxu0 0.0
        %314 = vmatpush1.msra.mxu0 0.0
        %315 = vmatprep.subr.mxu0 0.0
        %316 = vmatpush1.msra.mxu0 0.0
        %317 = vmatprep.subr.mxu0 0.0
        %318 = vmatpush1.msra.mxu0 0.0
        %319 = vmatprep.subr.mxu0 0.0
        %320 = vmatpush1.msra.mxu0 0.0
        %321 = vmatprep.subr.mxu0 0.0
        %322 = vmatpush1.msra.mxu0 0.0
        %323 = vmatprep.subr.mxu0 0.0
        %324 = vmatpush1.msra.mxu0 0.0
        %325 = vmatprep.subr.mxu0 0.0
        %326 = vmatpush1.msra.mxu0 0.0
        %327 = vmatprep.subr.mxu0 0.0
        %328 = vmatpush1.msra.mxu0 0.0
        %329 = vmatprep.subr.mxu0 0.0
        %330 = vmatpush1.msra.mxu0 0.0
        %331 = vmatprep.subr.mxu0 0.0
        %332 = vmatpush1.msra.mxu0 0.0
        %333 = vmatprep.subr.mxu0 0.0
        %334 = vmatpush1.msra.mxu0 0.0
        %335 = vmatprep.subr.mxu0 0.0
        %336 = vmatpush1.msra.mxu0 0.0
        %337 = vmatprep.subr.mxu0 0.0
        %338 = vmatpush1.msra.mxu0 0.0
        %339 = vmatprep.subr.mxu0 0.0
        %340 = vmatpush1.msra.mxu0 0.0
        %341 = vmatprep.subr.mxu0 0.0
        %342 = vmatpush1.msra.mxu0 0.0
        %343 = vmatprep.subr.mxu0 0.0
        %344 = vmatpush1.msra.mxu0 0.0
        %345 = vmatprep.subr.mxu0 0.0
        %346 = vmatpush1.msra.mxu0 0.0
        %347 = vmatprep.subr.mxu0 0.0
        %348 = vmatpush1.msra.mxu0 0.0
        %349 = vmatprep.subr.mxu0 0.0
        %350 = vmatpush1.msra.mxu0 0.0
        %351 = vmatprep.subr.mxu0 0.0
        %352 = vmatpush1.msra.mxu0 0.0
        %353 = vmatprep.subr.mxu0 0.0
        %354 = vmatpush1.msra.mxu0 0.0
        %355 = vmatprep.subr.mxu0 0.0
        %356 = vmatpush1.msra.mxu0 0.0
        %357 = vmatprep.mubr.f32.mxu0 0.0
        %358 = vmatmul.mubr.f32.gmra.mrb[0].mxu0 %v282
        %v359 = vpop.f32.mrb[0].mxu0
        %v360 = vadd.f32 %v263, %v359
        %v361 = vpop.f32.mrb[0].mxu0
        %362 = vmatprep.mubr.f32.mxu0 0.0
        %363 = vmatmul.mubr.f32.gmra.mrb[0].mxu0 %v285
        %v364 = vpop.f32.mrb[0].mxu0
        %v365 = vadd.f32 %v268, %v364
        %v366 = vpop.f32.mrb[0].mxu0
        %367 = vmatprep.mubr.f32.mxu0 0.0
        %368 = vmatmul.mubr.f32.gmra.mrb[0].mxu0 %v288
        %v369 = vpop.f32.mrb[0].mxu0
        %v370 = vadd.f32 %v273, %v369
        %v371 = vpop.f32.mrb[0].mxu0
        %372 = vmatprep.mubr.f32.mxu0 0.0
        %373 = vmatmul.mubr.f32.gmra.mrb[0].mxu0 %v291
        %v374 = vpop.f32.mrb[0].mxu0
        %v375 = vadd.f32 %v278, %v374
        %v376 = vpop.f32.mrb[0].mxu0
        %377 = vdwg.mxu0
        %v378 = vmax.f32 %v360, 0.0
        %v379 = vmax.f32 %v365, 0.0
        %v380 = vmax.f32 %v370, 0.0
        %v381 = vmax.f32 %v375, 0.0
        %v382 = vld [vmem:[#allocation5] sm:$0xff]
        %v383 = vld [vmem:[#allocation5 + $0x8] sm:$0xff]
        %v384 = vld [vmem:[#allocation5 + $0x10] sm:$0xff]
        %v385 = vld [vmem:[#allocation5 + $0x18] sm:$0xff]
        %386 = vset.pattern.permute.xlu0 1
        %387 = vperm.xlu0 %386, %v252
        %v388 = vpop.permute.xlu0 %387
        %390 = vset.pattern.permute.xlu0 1
        %391 = vperm.xlu0 %390, %v253
        %v392 = vpop.permute.xlu0 %391
        %394 = vset.pattern.permute.xlu0 1
        %395 = vperm.xlu0 %394, %v254
        %v396 = vpop.permute.xlu0 %395
        %398 = vset.pattern.permute.xlu0 1
        %399 = vperm.xlu0 %398, %v255
        %v400 = vpop.permute.xlu0 %399
        %v403 = vsel %vm280, %v382, 0
        %v406 = vsel %vm280, %v383, 0
        %v409 = vsel %vm280, %v384, 0
        %v412 = vsel %vm280, %v385, 0
        %414 = vmatprep.subr.mxu0 0.0
        %415 = vmatpush1.msra.mxu0 %v378
        %416 = vmatprep.subr.mxu0 0.0
        %417 = vmatpush1.msra.mxu0 %v379
        %418 = vmatprep.subr.mxu0 0.0
        %419 = vmatpush1.msra.mxu0 %v380
        %420 = vmatprep.subr.mxu0 0.0
        %421 = vmatpush1.msra.mxu0 %v381
        %422 = vmatprep.subr.mxu0 0.0
        %423 = vmatpush1.msra.mxu0 0.0
        %424 = vmatprep.subr.mxu0 0.0
        %425 = vmatpush1.msra.mxu0 0.0
        %426 = vmatprep.subr.mxu0 0.0
        %427 = vmatpush1.msra.mxu0 0.0
        %428 = vmatprep.subr.mxu0 0.0
        %429 = vmatpush1.msra.mxu0 0.0
        %430 = vmatprep.subr.mxu0 0.0
        %431 = vmatpush1.msra.mxu0 0.0
        %432 = vmatprep.subr.mxu0 0.0
        %433 = vmatpush1.msra.mxu0 0.0
        %434 = vmatprep.subr.mxu0 0.0
        %435 = vmatpush1.msra.mxu0 0.0
        %436 = vmatprep.subr.mxu0 0.0
        %437 = vmatpush1.msra.mxu0 0.0
        %438 = vmatprep.subr.mxu0 0.0
        %439 = vmatpush1.msra.mxu0 0.0
        %440 = vmatprep.subr.mxu0 0.0
        %441 = vmatpush1.msra.mxu0 0.0
        %442 = vmatprep.subr.mxu0 0.0
        %443 = vmatpush1.msra.mxu0 0.0
        %444 = vmatprep.subr.mxu0 0.0
        %445 = vmatpush1.msra.mxu0 0.0
        %446 = vmatprep.subr.mxu0 0.0
        %447 = vmatpush1.msra.mxu0 0.0
        %448 = vmatprep.subr.mxu0 0.0
        %449 = vmatpush1.msra.mxu0 0.0
        %450 = vmatprep.subr.mxu0 0.0
        %451 = vmatpush1.msra.mxu0 0.0
        %452 = vmatprep.subr.mxu0 0.0
        %453 = vmatpush1.msra.mxu0 0.0
        %454 = vmatprep.subr.mxu0 0.0
        %455 = vmatpush1.msra.mxu0 0.0
        %456 = vmatprep.subr.mxu0 0.0
        %457 = vmatpush1.msra.mxu0 0.0
        %458 = vmatprep.subr.mxu0 0.0
        %459 = vmatpush1.msra.mxu0 0.0
        %460 = vmatprep.subr.mxu0 0.0
        %461 = vmatpush1.msra.mxu0 0.0
        %462 = vmatprep.subr.mxu0 0.0
        %463 = vmatpush1.msra.mxu0 0.0
        %464 = vmatprep.subr.mxu0 0.0
        %465 = vmatpush1.msra.mxu0 0.0
        %466 = vmatprep.subr.mxu0 0.0
        %467 = vmatpush1.msra.mxu0 0.0
        %468 = vmatprep.subr.mxu0 0.0
        %469 = vmatpush1.msra.mxu0 0.0
        %470 = vmatprep.subr.mxu0 0.0
        %471 = vmatpush1.msra.mxu0 0.0
        %472 = vmatprep.subr.mxu0 0.0
        %473 = vmatpush1.msra.mxu0 0.0
        %474 = vmatprep.subr.mxu0 0.0
        %475 = vmatpush1.msra.mxu0 0.0
        %476 = vmatprep.subr.mxu0 0.0
        %477 = vmatpush1.msra.mxu0 0.0
        %478 = vmatprep.mubr.f32.mxu0 0.0
        %479 = vmatmul.mubr.f32.gmra.mrb[0].mxu0 %v403
        %v480 = vpop.f32.mrb[0].mxu0
        %v481 = vadd.f32 %v388, %v480
        %v482 = vpop.f32.mrb[0].mxu0
        %483 = vmatprep.mubr.f32.mxu0 0.0
        %484 = vmatmul.mubr.f32.gmra.mrb[0].mxu0 %v406
        %v485 = vpop.f32.mrb[0].mxu0
        %v486 = vadd.f32 %v392, %v485
        %v487 = vpop.f32.mrb[0].mxu0
        %488 = vmatprep.mubr.f32.mxu0 0.0
        %489 = vmatmul.mubr.f32.gmra.mrb[0].mxu0 %v409
        %v490 = vpop.f32.mrb[0].mxu0
        %v491 = vadd.f32 %v396, %v490
        %v492 = vpop.f32.mrb[0].mxu0
        %493 = vmatprep.mubr.f32.mxu0 0.0
        %494 = vmatmul.mubr.f32.gmra.mrb[0].mxu0 %v412
        %v495 = vpop.f32.mrb[0].mxu0
        %v496 = vadd.f32 %v400, %v495
        %v497 = vpop.f32.mrb[0].mxu0
        %498 = vdwg.mxu0
        %v499 = vadd.f32 %v481, %v248
        %v500 = vadd.f32 %v486, %v249
        %v501 = vadd.f32 %v491, %v250
        %v502 = vadd.f32 %v496, %v251
        %v503 = vadd.f32 %v499, %v500
        %v504 = vadd.f32 %v503, %v501
        %v505 = vadd.f32 %v504, %v502
        %v506 = vrot.slane %v505, 4
        %v507 = vadd.f32 %v505, %v506
        %v508 = vrot.slane %v507, 2
        %v509 = vadd.f32 %v507, %v508
        %v510 = vrot.slane %v509, 1
        %v511 = vadd.f32 %v509, %v510
        %v512 = vmul.f32 %v511, 0.03125
        %v513 = vsub.f32 %v499, %v512
        %v514 = vsub.f32 %v500, %v512
        %v515 = vsub.f32 %v501, %v512
        %v516 = vsub.f32 %v502, %v512
        %v517 = vmul.f32 %v513, %v513
        %v518 = vmul.f32 %v514, %v514
        %v519 = vmul.f32 %v515, %v515
        %v520 = vmul.f32 %v516, %v516
        %v521 = vadd.f32 %v517, %v518
        %v522 = vadd.f32 %v521, %v519
        %v523 = vadd.f32 %v522, %v520
        %v524 = vrot.slane %v523, 4
        %v525 = vadd.f32 %v523, %v524
        %v526 = vrot.slane %v525, 2
        %v527 = vadd.f32 %v525, %v526
        %v528 = vrot.slane %v527, 1
        %v529 = vadd.f32 %v527, %v528
        %v530 = vmul.f32 %v529, 0.03125
        %v531 = vadd.f32 %v530, 1e-05
        %v532 = vrsqrt.pop %v531
        %v533 = vmul.f32 %v513, %v532
        %v534 = vmul.f32 %v514, %v532
        %v535 = vmul.f32 %v515, %v532
        %v536 = vmul.f32 %v516, %v532
        %537 = vset.pattern.permute.xlu0 2
        %538 = vperm.xlu0 %537, %v252
        %v539 = vpop.permute.xlu0 %538
        %541 = vset.pattern.permute.xlu0 2
        %542 = vperm.xlu0 %541, %v253
        %v543 = vpop.permute.xlu0 %542
        %545 = vset.pattern.permute.xlu0 2
        %546 = vperm.xlu0 %545, %v254
        %v547 = vpop.permute.xlu0 %546
        %549 = vset.pattern.permute.xlu0 2
        %550 = vperm.xlu0 %549, %v255
        %v551 = vpop.permute.xlu0 %550
        %v553 = vmul.f32 %v533, %v539
        %v554 = vmul.f32 %v534, %v543
        %v555 = vmul.f32 %v535, %v547
        %v556 = vmul.f32 %v536, %v551
        %557 = vset.pattern.permute.xlu0 3
        %558 = vperm.xlu0 %557, %v252
        %v559 = vpop.permute.xlu0 %558
        %561 = vset.pattern.permute.xlu0 3
        %562 = vperm.xlu0 %561, %v253
        %v563 = vpop.permute.xlu0 %562
        %565 = vset.pattern.permute.xlu0 3
        %566 = vperm.xlu0 %565, %v254
        %v567 = vpop.permute.xlu0 %566
        %569 = vset.pattern.permute.xlu0 3
        %570 = vperm.xlu0 %569, %v255
        %v571 = vpop.permute.xlu0 %570
        %v573 = vadd.f32 %v553, %v559
        %v574 = vadd.f32 %v554, %v563
        %v575 = vadd.f32 %v555, %v567
        %v576 = vadd.f32 %v556, %v571
        %577 = vst [vmem:[%s247] sm:$0xff] %v573
        %578 = vst [vmem:[%s247 + $0x8] sm:$0xff] %v574
        %579 = vst [vmem:[%s247 + $0x10] sm:$0xff] %v575
        %580 = vst [vmem:[%s247 + $0x18] sm:$0xff] %v576
        %s581 = sand.u32 %s135, 1
        %s582 = scalar_lea.sflag [#allocation4], %s581
        %s583 = sand.u32 %s135, 1
        %s584 = smul.addr %s583, 32
        %s585 = scalar_lea.vmem [#allocation7], %s584
        // Predicated region
        $region45: #{tpu_custom_call.1} parent=35 // pred_check
          %p586 = pneg %p145
        $region46: #{tpu_custom_call.1} parent=35 // pred_check_branch
          %588 = sbr.rel (%p586) target = $region48
        $region47: #{tpu_custom_call.1} parent=35 // pred_region
          %s590 = ssub.s32 512, 512
          %591 = vsyncadd %s582, %s590
          %s592 = smul.addr %s26, 8
          %s593 = sadd.s32 %s27, %s592
          %s594 = smul.addr %s593, 128
          %s595 = scalar_lea.hbm %s4, %s594
          %s596 = sshll.u32 %s585, 4
          %s597 = int_to_ptr.vmem [resolvable:$true] %s596
          %602 = dma.vmem_to_hbm [thread:$0]  %s597, 512, %s595, %s582, 128, 256, 8
        $region48: #{tpu_custom_call.1} parent=35 // pred_fallthru
          _
      $region36: #{tpu_custom_call.1} parent=5 // pred_fallthru
        _
      %p603 = scmp.le.s32.totalorder 2, %s17
      // Predicated region
      $region49: #{tpu_custom_call.1} parent=5 // pred_check
        %p604 = pneg %p603
      $region50: #{tpu_custom_call.1} parent=5 // pred_check_branch
        %606 = sbr.rel (%p604) target = $region52
      $region51: #{tpu_custom_call.1} parent=5 // pred_region
        %s607 = ssub.s32 %s17, 2
        // Predicated region
        $region53: #{tpu_custom_call.1} parent=51 // pred_check
          %p608 = pneg %p151
        $region54: #{tpu_custom_call.1} parent=51 // pred_check_branch
          %610 = sbr.rel (%p608) target = $region56
        $region55: #{tpu_custom_call.1} parent=51 // pred_region
          %s611 = sand.u32 %s136, 1
          %s612 = scalar_lea.sflag [#allocation4], %s611
          %s613 = sand.u32 %s136, 1
          %s614 = smul.addr %s613, 32
          %s615 = scalar_lea.vmem [#allocation7], %s614
          %616 = dma.done %s612, 512
        $region56: #{tpu_custom_call.1} parent=51 // pred_fallthru
          _
      $region52: #{tpu_custom_call.1} parent=5 // pred_fallthru
        _
    $region6: #{tpu_custom_call.1} parent=1 // loop_footer
      %s21 = sadd.s32 1, %s17
    $region7: #{tpu_custom_call.1} parent=1 // loop_footer_branch
      %16 = sbr.rel target = $region3
    $region8: #{tpu_custom_call.1} parent=1 // loop_exit
      _
    %617 = vsyncpa [#allocation3], 1
    %s618 = scalar_lea.sflag [#allocation3], 1
    %619 = vsyncpa %s618, 1
    %620 = vsyncpa [#allocation6], 1
    %621 = vsyncpa [#allocation4], 1
    %s622 = scalar_lea.sflag [#allocation4], 1
    %623 = vsyncpa %s622, 1

</llo_original>
